<compile_context>
chip_gen: v5e
topology: v5e:2x2
jax: 0.10.0
libtpu: 0.0.40
codegen_flags: <defaults>
</compile_context>

<pallas_src>
import jax
import jax.numpy as jnp
from jax import lax
from jax.experimental import pallas as pl
from jax.experimental.pallas import tpu as pltpu

_HIDDEN = 40
_LANE = 128
_SUBLANE = 8
_X_VMEM_BUDGET = 24 << 20   # bytes for double-buffered x + output tiles (safe on all gens)
_MAX_TILE_B = 8192


def _mlp_kernel(x_ref, w1_ref, b1_ref, w2_ref, b2_ref, w3_ref, b3_ref, o_ref):
    # x tile: (TILE_B, d_in). All activations are feature-major: (features, TILE_B).
    x = x_ref[...]

    # layer 1: W1 (40, d_in) contracted with x (TILE_B, d_in) over d_in -> (40, TILE_B).
    # NOTE: contraction is over x's minor (lane) dim; for small d_in any Mosaic
    # relayout hides under the x DMA.  If d_in grows large, consider contracting
    # with a pre-transposed (d_in, 40) w1 so the relayout lands on the 40-wide side.
    h1 = lax.dot_general(
        w1_ref[...], x,
        dimension_numbers=(((1,), (1,)), ((), ())),
        preferred_element_type=jnp.float32,
    )
    h1 = jnp.maximum(h1 + b1_ref[...], 0.0)           # b1: (40, 1) broadcasts over lanes

    # layer 2: (40, 40) @ (40, TILE_B) -> (40, TILE_B)
    h2 = jnp.dot(w2_ref[...], h1, preferred_element_type=jnp.float32)
    h2 = jnp.maximum(h2 + b2_ref[...], 0.0)

    # layer 3 (out_features = 1): VPU multiply + sublane reduce -> (1, TILE_B)
    logit = jnp.sum(h2 * w3_ref[...], axis=0, keepdims=True) + b3_ref[...]

    o_ref[...] = jax.nn.sigmoid(logit).astype(o_ref.dtype)   # lane-dense store


def _round_up(x, m):
    return m * pl.cdiv(x, m)


def _pick_tile_b(B, d_in):
    """VMEM- and d_in-aware batch tile.

    Multiple of 128 (lane-dense output), as large as possible (up to 8192) to
    amortise the ~0.35 us per-grid-step overhead, but:
      * the double-buffered, lane-padded x tile + output tile must fit a
        conservative 24 MiB budget (safe on v5e/v6e/v7x scoped VMEM);
      * large batches keep >= 2 grid steps so ("parallel",) can shard across
        v7x's 2 TensorCores.
    """
    d_pad = _round_up(max(d_in, 1), _LANE)                 # x minor dim is lane-padded
    bytes_per_row = 2 * d_pad * 4 + 2 * _SUBLANE * 4       # x dbl-buf + out dbl-buf
    vmem_cap = max(_LANE, (_X_VMEM_BUDGET // bytes_per_row) // _LANE * _LANE)
    half = _round_up(pl.cdiv(B, 2), _LANE)                 # keep >= 2 grid steps
    return int(max(_LANE, min(half, _MAX_TILE_B, vmem_cap)))


def _vmem_limit_bytes(tile_b, d_in, h=_HIDDEN):
    """Explicit scoped-VMEM request: x/out double buffers + (padded) resident weights."""
    d_pad = _round_up(max(d_in, 1), _LANE)
    h_sub = _round_up(h, _SUBLANE)
    x_buf = 2 * tile_b * d_pad * 4
    o_buf = 2 * _SUBLANE * tile_b * 4
    w_buf = 2 * 4 * (h_sub * d_pad + 3 * h_sub * _LANE + _SUBLANE * _LANE)
    return int(min(48 << 20, x_buf + o_buf + w_buf + (4 << 20)))


def nn_forward(x, params, *, tile_b=None):
    """x: (B, d_in) float32.  params: PyTorch-layout weights (see init_params)."""
    B, d_in = x.shape
    w1, b1 = params["w1"], params["b1"]   # (40, d_in), (40, 1)
    w2, b2 = params["w2"], params["b2"]   # (40, 40),   (40, 1)
    w3, b3 = params["w3"], params["b3"]   # (40, 1),    (1, 1)
    h = w1.shape[0]

    if tile_b is None:
        tile_b = _pick_tile_b(B, d_in)

    # No padding copy of x: ragged last block; OOB output columns dropped on writeback.
    grid = (pl.cdiv(B, tile_b),)

    flops = B * (2 * d_in * h + 2 * h * h + 2 * h)
    weight_bytes = 4 * (h * d_in + h + h * h + h + h + 1)
    cost = pl.CostEstimate(
        flops=flops,
        transcendentals=B,                                   # sigmoid exp per row
        bytes_accessed=B * 4 * (d_in + 1) + weight_bytes,
    )

    out = pl.pallas_call(
        _mlp_kernel,
        out_shape=jax.ShapeDtypeStruct((1, B), jnp.float32),
        grid=grid,
        in_specs=[
            pl.BlockSpec((tile_b, d_in), lambda i: (i, 0)),   # x tile (batch-tiled, ragged tail ok)
            pl.BlockSpec((h, d_in),      lambda i: (0, 0)),   # w1 (resident)
            pl.BlockSpec((h, 1),         lambda i: (0, 0)),   # b1
            pl.BlockSpec((h, h),         lambda i: (0, 0)),   # w2
            pl.BlockSpec((h, 1),         lambda i: (0, 0)),   # b2
            pl.BlockSpec((h, 1),         lambda i: (0, 0)),   # w3 (as a column)
            pl.BlockSpec((1, 1),         lambda i: (0, 0)),   # b3
        ],
        out_specs=pl.BlockSpec((1, tile_b), lambda i: (0, i)),  # lane-dense output slab
        compiler_params=pltpu.CompilerParams(
            dimension_semantics=("parallel",),
            vmem_limit_bytes=_vmem_limit_bytes(tile_b, d_in, h),
        ),
        cost_estimate=cost,
    )(x, w1, b1, w2, b2, w3, b3)

    # (1, B) -> (B, 1); wrapper-side reshape is layout plumbing only.
    return out[0, :, None]


def init_params(key, d_in, hidden=_HIDDEN):
    """Deterministic init mimicking nn.Linear default (uniform +/- 1/sqrt(fan_in)).

    Weights are stored in PyTorch layout (out_features, in_features); biases as
    column vectors (out_features, 1) so they broadcast over the lane/batch axis
    inside the kernel.  w3 is stored as a (40, 1) column for the VPU reduction.
    """
    ks = jax.random.split(key, 6)

    def lin(kw, kb, fan_in, fan_out):
        bound = 1.0 / jnp.sqrt(fan_in)
        w = jax.random.uniform(kw, (fan_out, fan_in), jnp.float32, -bound, bound)
        b = jax.random.uniform(kb, (fan_out, 1), jnp.float32, -bound, bound)
        return w, b

    w1, b1 = lin(ks[0], ks[1], d_in, hidden)      # (40, d_in), (40, 1)
    w2, b2 = lin(ks[2], ks[3], hidden, hidden)    # (40, 40),   (40, 1)
    w3, b3 = lin(ks[4], ks[5], hidden, 1)         # (1, 40),    (1, 1)
    return {"w1": w1, "b1": b1, "w2": w2, "b2": b2, "w3": w3.T, "b3": b3}


def nn_forward_ref(x, p):
    h1 = jnp.maximum(x @ p["w1"].T + p["b1"].T, 0.0)
    h2 = jnp.maximum(h1 @ p["w2"].T + p["b2"].T, 0.0)
    return jax.nn.sigmoid(h2 @ p["w3"] + p["b3"])


if __name__ == "__main__":
    key = jax.random.PRNGKey(0)
    k_x1, k_x2, k_p = jax.random.split(key, 3)

    d_in = 32
    params = init_params(k_p, d_in)

    # Small batch: single ragged block (tile_b=128 > B=8).
    B1 = 8
    x1 = jax.random.normal(k_x1, (B1, d_in), jnp.float32)
    out1 = jax.block_until_ready(nn_forward(x1, params))
    ref1 = nn_forward_ref(x1, params)
    assert out1.shape == (B1, 1), out1.shape
    assert jnp.allclose(out1, ref1, atol=1e-5, rtol=1e-5), (
        f"max abs err {jnp.max(jnp.abs(out1 - ref1))}"
    )

    # Unaligned batch: exercises the no-pad ragged last block across 2 grid steps.
    B2 = 300
    x2 = jax.random.normal(k_x2, (B2, d_in), jnp.float32)
    out2 = jax.block_until_ready(nn_forward(x2, params))
    ref2 = nn_forward_ref(x2, params)
    assert out2.shape == (B2, 1), out2.shape
    assert jnp.allclose(out2, ref2, atol=1e-5, rtol=1e-5), (
        f"max abs err {jnp.max(jnp.abs(out2 - ref2))}"
    )

    print("KERNEL_OK")
</pallas_src>

<mosaic_0001>
module attributes {stable_mosaic.version = 11 : i64} {
  func.func @_mlp_kernel(%arg0: i32, %arg1: memref<128x32xf32, #tpu.memory_space<vmem>>, %arg2: memref<40x32xf32, #tpu.memory_space<vmem>>, %arg3: memref<40x1xf32, #tpu.memory_space<vmem>>, %arg4: memref<40x40xf32, #tpu.memory_space<vmem>>, %arg5: memref<40x1xf32, #tpu.memory_space<vmem>>, %arg6: memref<40x1xf32, #tpu.memory_space<vmem>>, %arg7: memref<1x1xf32, #tpu.memory_space<vmem>>, %arg8: memref<1x128xf32, #tpu.memory_space<vmem>>) attributes {dimension_semantics = [#tpu.dimension_semantics<parallel>], iteration_bounds = array<i64: 1>, scalar_prefetch = 0 : i64, scratch_operands = 0 : i64, tpu.core_type = #tpu.core_type<tc>, window_params = [{transform_indices = @transform_0, window_bounds = array<i64: 128, 32>}, {pipeline_mode = #tpu.pipeline_mode<synchronous>, transform_indices = @transform_1, window_bounds = array<i64: 40, 32>}, {pipeline_mode = #tpu.pipeline_mode<synchronous>, transform_indices = @transform_2, window_bounds = array<i64: 40, 1>}, {pipeline_mode = #tpu.pipeline_mode<synchronous>, transform_indices = @transform_3, window_bounds = array<i64: 40, 40>}, {pipeline_mode = #tpu.pipeline_mode<synchronous>, transform_indices = @transform_4, window_bounds = array<i64: 40, 1>}, {pipeline_mode = #tpu.pipeline_mode<synchronous>, transform_indices = @transform_5, window_bounds = array<i64: 40, 1>}, {pipeline_mode = #tpu.pipeline_mode<synchronous>, transform_indices = @transform_6, window_bounds = array<i64: 1, 1>}, {transform_indices = @transform_7, window_bounds = array<i64: 1, 128>}]} {
    %c0 = arith.constant 0 : index
    %c0_0 = arith.constant 0 : index
    %0 = vector.load %arg1[%c0, %c0_0] : memref<128x32xf32, #tpu.memory_space<vmem>>, vector<128x32xf32>
    %c0_1 = arith.constant 0 : index
    %c0_2 = arith.constant 0 : index
    %1 = vector.load %arg2[%c0_1, %c0_2] : memref<40x32xf32, #tpu.memory_space<vmem>>, vector<40x32xf32>
    %cst = arith.constant dense<0.000000e+00> : vector<40x128xf32>
    %2 = tpu.matmul %1, %0, %cst {dimension_numbers = #tpu.dot_dimension_numbers<[1], [1], [0], [0], [0, 0, 1, 0], [], []>} : vector<40x32xf32>, vector<128x32xf32>, vector<40x128xf32> -> vector<40x128xf32>
    %c0_3 = arith.constant 0 : index
    %c0_4 = arith.constant 0 : index
    %3 = vector.load %arg3[%c0_3, %c0_4] : memref<40x1xf32, #tpu.memory_space<vmem>>, vector<40x1xf32>
    %4 = vector.broadcast %3 : vector<40x1xf32> to vector<40x128xf32>
    %5 = arith.addf %2, %4 : vector<40x128xf32>
    %cst_5 = arith.constant 0.000000e+00 : f32
    %6 = vector.broadcast %cst_5 : f32 to vector<40x128xf32>
    %7 = arith.maximumf %5, %6 : vector<40x128xf32>
    %c0_6 = arith.constant 0 : index
    %c0_7 = arith.constant 0 : index
    %8 = vector.load %arg4[%c0_6, %c0_7] : memref<40x40xf32, #tpu.memory_space<vmem>>, vector<40x40xf32>
    %cst_8 = arith.constant dense<0.000000e+00> : vector<40x128xf32>
    %9 = tpu.matmul %8, %7, %cst_8 {dimension_numbers = #tpu.dot_dimension_numbers<[1], [0], [0], [1], [0, 0, 1, 1], [], []>} : vector<40x40xf32>, vector<40x128xf32>, vector<40x128xf32> -> vector<40x128xf32>
    %c0_9 = arith.constant 0 : index
    %c0_10 = arith.constant 0 : index
    %10 = vector.load %arg5[%c0_9, %c0_10] : memref<40x1xf32, #tpu.memory_space<vmem>>, vector<40x1xf32>
    %11 = vector.broadcast %10 : vector<40x1xf32> to vector<40x128xf32>
    %12 = arith.addf %9, %11 : vector<40x128xf32>
    %cst_11 = arith.constant 0.000000e+00 : f32
    %13 = vector.broadcast %cst_11 : f32 to vector<40x128xf32>
    %14 = arith.maximumf %12, %13 : vector<40x128xf32>
    %c0_12 = arith.constant 0 : index
    %c0_13 = arith.constant 0 : index
    %15 = vector.load %arg6[%c0_12, %c0_13] : memref<40x1xf32, #tpu.memory_space<vmem>>, vector<40x1xf32>
    %16 = vector.broadcast %15 : vector<40x1xf32> to vector<40x128xf32>
    %17 = arith.mulf %14, %16 : vector<40x128xf32>
    %cst_14 = arith.constant dense<0.000000e+00> : vector<128xf32>
    %18 = vector.multi_reduction <add>, %17, %cst_14 [0] : vector<40x128xf32> to vector<128xf32>
    %19 = vector.shape_cast %18 : vector<128xf32> to vector<1x128xf32>
    %c0_15 = arith.constant 0 : index
    %c0_16 = arith.constant 0 : index
    %20 = vector.load %arg7[%c0_15, %c0_16] : memref<1x1xf32, #tpu.memory_space<vmem>>, vector<1x1xf32>
    %21 = vector.broadcast %20 : vector<1x1xf32> to vector<1x128xf32>
    %22 = arith.addf %19, %21 : vector<1x128xf32>
    %23 = arith.negf %22 : vector<1x128xf32>
    %24 = math.exp %23 : vector<1x128xf32>
    %cst_17 = arith.constant 1.000000e+00 : f32
    %25 = vector.broadcast %cst_17 : f32 to vector<1x128xf32>
    %26 = arith.addf %25, %24 : vector<1x128xf32>
    %27 = arith.divf %25, %26 : vector<1x128xf32>
    %c0_18 = arith.constant 0 : index
    %c0_19 = arith.constant 0 : index
    %28 = vector.load %arg8[%c0_18, %c0_19] : memref<1x128xf32, #tpu.memory_space<vmem>>, vector<1x128xf32>
    tpu.vector_store %arg8[%c0_18, %c0_19], %27 {strides = array<i32>} : memref<1x128xf32, #tpu.memory_space<vmem>>, vector<1x128xf32>,
    return
  }
  func.func @transform_0(%arg0: i32) -> (i32, i32) {
    %c0_i32 = arith.constant 0 : i32
    %c0_i32_0 = arith.constant 0 : i32
    return %arg0, %c0_i32 : i32, i32
  }
  func.func @transform_1(%arg0: i32) -> (i32, i32) {
    %c0_i32 = arith.constant 0 : i32
    %c0_i32_0 = arith.constant 0 : i32
    %c0_i32_1 = arith.constant 0 : i32
    return %c0_i32, %c0_i32_0 : i32, i32
  }
  func.func @transform_2(%arg0: i32) -> (i32, i32) {
    %c0_i32 = arith.constant 0 : i32
    %c0_i32_0 = arith.constant 0 : i32
    %c0_i32_1 = arith.constant 0 : i32
    return %c0_i32, %c0_i32_0 : i32, i32
  }
  func.func @transform_3(%arg0: i32) -> (i32, i32) {
    %c0_i32 = arith.constant 0 : i32
    %c0_i32_0 = arith.constant 0 : i32
    %c0_i32_1 = arith.constant 0 : i32
    return %c0_i32, %c0_i32_0 : i32, i32
  }
  func.func @transform_4(%arg0: i32) -> (i32, i32) {
    %c0_i32 = arith.constant 0 : i32
    %c0_i32_0 = arith.constant 0 : i32
    %c0_i32_1 = arith.constant 0 : i32
    return %c0_i32, %c0_i32_0 : i32, i32
  }
  func.func @transform_5(%arg0: i32) -> (i32, i32) {
    %c0_i32 = arith.constant 0 : i32
    %c0_i32_0 = arith.constant 0 : i32
    %c0_i32_1 = arith.constant 0 : i32
    return %c0_i32, %c0_i32_0 : i32, i32
  }
  func.func @transform_6(%arg0: i32) -> (i32, i32) {
    %c0_i32 = arith.constant 0 : i32
    %c0_i32_0 = arith.constant 0 : i32
    %c0_i32_1 = arith.constant 0 : i32
    return %c0_i32, %c0_i32_0 : i32, i32
  }
  func.func @transform_7(%arg0: i32) -> (i32, i32) {
    %c0_i32 = arith.constant 0 : i32
    %c0_i32_0 = arith.constant 0 : i32
    return %c0_i32, %arg0 : i32, i32
  }
}

</mosaic_0001>

<llo_original>
// kernel: tpu_custom_call.1
$region0: #{tpu_custom_call.1}
  #allocation0 [shape = 'u32[]', space=smem, size = 0x4, offset = 0x4, fixed_abs, tag = 'smem constant byte address 0x4 - core index']
  #allocation1 [shape = 'u32[72,128]{1,0:T(1,128)}', space=vmem, size = 0x9000, scoped, tag = 'internal scratch']
  #allocation2 [shape = 'f32[1,1]{1,0:T(1,128)S(1)}', space=vmem, size = 0x200, scoped, tag = 'scoped memory for tpu_custom_call.1']
  %s0 = inlined_call_operand.vmem [shape: f32[8,32], index: 0, kind: input, shape index: {}]
  %s1 = inlined_call_operand.vmem [shape: f32[40,32], index: 1, kind: input, shape index: {}]
  %s2 = inlined_call_operand.vmem [shape: f32[40,1], index: 2, kind: input, shape index: {}]
  %s3 = inlined_call_operand.vmem [shape: f32[40,40], index: 3, kind: input, shape index: {}]
  %s4 = inlined_call_operand.vmem [shape: f32[40,1], index: 4, kind: input, shape index: {}]
  %s5 = inlined_call_operand.vmem [shape: f32[40,1], index: 5, kind: input, shape index: {}]
  %s6 = inlined_call_operand.<no memory space> [shape: f32[1,1], index: 6, kind: input, shape index: {}]
  %s7 = inlined_call_operand.hbm [shape: f32[1,8], index: 7, kind: output, shape index: {}]
  %s8 = sld [smem:[#allocation0]]
  $region38: #{tpu_custom_call.1} parent=0
    _
  %s10 = ssub.s32 1, %s8
  %s11 = scalar_select 0, %s10, %s8
  %v12 = vstv %s6
  %13 = vst [vmem:[#allocation2] sm:$0x1] %v12
  $region1: #{tpu_custom_call.1} parent=0
    #allocation3 [shape = 'u8[512]{0}', space=vmem, size = 0x400, scoped, tag = 'output window, operand 0, single buffered']
    #allocation4 [shape = 's32[1]{0}', space=sflag, size = 0x4, scoped, tag = 'scoped memory for tpu_custom_call.1']
    %14 = vsyncpa [#allocation4], 0
    // Predicated region
    $region2: #{tpu_custom_call.1} parent=1 // pred_check
      _
    $region3: #{tpu_custom_call.1} parent=1 // pred_check_branch
      %16 = sbr.rel (0) target = $region5
    $region4: #{tpu_custom_call.1} parent=1 // pred_region
      _
    $region5: #{tpu_custom_call.1} parent=1 // pred_fallthru
      _
    // Predicated region
    $region6: #{tpu_custom_call.1} parent=1 // pred_check
      _
    $region7: #{tpu_custom_call.1} parent=1 // pred_check_branch
      %18 = sbr.rel (0) target = $region9
    $region8: #{tpu_custom_call.1} parent=1 // pred_region
      _
    $region9: #{tpu_custom_call.1} parent=1 // pred_fallthru
      _
    // Predicated region
    $region10: #{tpu_custom_call.1} parent=1 // pred_check
      _
    $region11: #{tpu_custom_call.1} parent=1 // pred_check_branch
      %20 = sbr.rel (0) target = $region13
    $region12: #{tpu_custom_call.1} parent=1 // pred_region
      _
    $region13: #{tpu_custom_call.1} parent=1 // pred_fallthru
      _
    // Predicated region
    $region14: #{tpu_custom_call.1} parent=1 // pred_check
      _
    $region15: #{tpu_custom_call.1} parent=1 // pred_check_branch
      %22 = sbr.rel (0) target = $region17
    $region16: #{tpu_custom_call.1} parent=1 // pred_region
      _
    $region17: #{tpu_custom_call.1} parent=1 // pred_fallthru
      _
    // Predicated region
    $region18: #{tpu_custom_call.1} parent=1 // pred_check
      _
    $region19: #{tpu_custom_call.1} parent=1 // pred_check_branch
      %24 = sbr.rel (0) target = $region21
    $region20: #{tpu_custom_call.1} parent=1 // pred_region
      _
    $region21: #{tpu_custom_call.1} parent=1 // pred_fallthru
      _
    // Predicated region
    $region22: #{tpu_custom_call.1} parent=1 // pred_check
      _
    $region23: #{tpu_custom_call.1} parent=1 // pred_check_branch
      %26 = sbr.rel (0) target = $region25
    $region24: #{tpu_custom_call.1} parent=1 // pred_region
      _
    $region25: #{tpu_custom_call.1} parent=1 // pred_fallthru
      _
    // Predicated region
    $region26: #{tpu_custom_call.1} parent=1 // pred_check
      _
    $region27: #{tpu_custom_call.1} parent=1 // pred_check_branch
      %28 = sbr.rel (0) target = $region29
    $region28: #{tpu_custom_call.1} parent=1 // pred_region
      _
    $region29: #{tpu_custom_call.1} parent=1 // pred_fallthru
      _
    %v29 = vld [vmem:[%s0] sm:$0xff]
    %v30 = vld [vmem:[%s0 + $0x8] sm:$0xff]
    %v31 = vld [vmem:[%s0 + $0x10] sm:$0xff]
    %v32 = vld [vmem:[%s0 + $0x18] sm:$0xff]
    %v33 = vld [vmem:[%s0 + $0x20] sm:$0xff]
    %v34 = vld [vmem:[%s0 + $0x28] sm:$0xff]
    %v35 = vld [vmem:[%s0 + $0x30] sm:$0xff]
    %v36 = vld [vmem:[%s0 + $0x38] sm:$0xff]
    %v37 = vld [vmem:[%s0 + $0x40] sm:$0xff]
    %v38 = vld [vmem:[%s0 + $0x48] sm:$0xff]
    %v39 = vld [vmem:[%s0 + $0x50] sm:$0xff]
    %v40 = vld [vmem:[%s0 + $0x58] sm:$0xff]
    %v41 = vld [vmem:[%s0 + $0x60] sm:$0xff]
    %v42 = vld [vmem:[%s0 + $0x68] sm:$0xff]
    %v43 = vld [vmem:[%s0 + $0x70] sm:$0xff]
    %v44 = vld [vmem:[%s0 + $0x78] sm:$0xff]
    %v45 = vld [vmem:[%s1] sm:$0xff]
    %v46 = vld [vmem:[%s1 + $0x8] sm:$0xff]
    %v47 = vld [vmem:[%s1 + $0x10] sm:$0xff]
    %v48 = vld [vmem:[%s1 + $0x18] sm:$0xff]
    %v49 = vld [vmem:[%s1 + $0x20] sm:$0xff]
    %v50 = vld [vmem:[%s2] sm:$0xff]
    %v51 = vld [vmem:[%s2 + $0x8] sm:$0xff]
    %v52 = vld [vmem:[%s2 + $0x10] sm:$0xff]
    %v53 = vld [vmem:[%s2 + $0x18] sm:$0xff]
    %v54 = vld [vmem:[%s2 + $0x20] sm:$0xff]
    %56 = vset.pattern.permute.xlu0 0
    %57 = vperm.xlu0 %56, %v50
    %v58 = vpop.permute.xlu0 %57
    %61 = vset.pattern.permute.xlu0 0
    %62 = vperm.xlu0 %61, %v51
    %v63 = vpop.permute.xlu0 %62
    %66 = vset.pattern.permute.xlu0 0
    %67 = vperm.xlu0 %66, %v52
    %v68 = vpop.permute.xlu0 %67
    %71 = vset.pattern.permute.xlu0 0
    %72 = vperm.xlu0 %71, %v53
    %v73 = vpop.permute.xlu0 %72
    %76 = vset.pattern.permute.xlu0 0
    %77 = vperm.xlu0 %76, %v54
    %v78 = vpop.permute.xlu0 %77
    %vm80 = vcmask 261120
    %v82 = vsel %vm80, %v45, 0
    %v85 = vsel %vm80, %v46, 0
    %v88 = vsel %vm80, %v47, 0
    %v91 = vsel %vm80, %v48, 0
    %v94 = vsel %vm80, %v49, 0
    %v97 = vsel %vm80, %v29, 0
    %v100 = vsel %vm80, %v30, 0
    %v103 = vsel %vm80, %v31, 0
    %v106 = vsel %vm80, %v32, 0
    %v109 = vsel %vm80, %v33, 0
    %v112 = vsel %vm80, %v34, 0
    %v115 = vsel %vm80, %v35, 0
    %v118 = vsel %vm80, %v36, 0
    %v121 = vsel %vm80, %v37, 0
    %v124 = vsel %vm80, %v38, 0
    %v127 = vsel %vm80, %v39, 0
    %v130 = vsel %vm80, %v40, 0
    %v133 = vsel %vm80, %v41, 0
    %v136 = vsel %vm80, %v42, 0
    %v139 = vsel %vm80, %v43, 0
    %v142 = vsel %vm80, %v44, 0
    %144 = vmatpush.xpose.msra.mxu0 %v142
    %145 = vmatpush.xpose.msra.mxu0 %v139
    %146 = vmatpush.xpose.msra.mxu0 %v136
    %147 = vmatpush.xpose.msra.mxu0 %v133
    %148 = vmatpush.xpose.msra.mxu0 %v130
    %149 = vmatpush.xpose.msra.mxu0 %v127
    %150 = vmatpush.xpose.msra.mxu0 %v124
    %151 = vmatpush.xpose.msra.mxu0 %v121
    %152 = vmatpush.xpose.msra.mxu0 %v118
    %153 = vmatpush.xpose.msra.mxu0 %v115
    %154 = vmatpush.xpose.msra.mxu0 %v112
    %155 = vmatpush.xpose.msra.mxu0 %v109
    %156 = vmatpush.xpose.msra.mxu0 %v106
    %157 = vmatpush.xpose.msra.mxu0 %v103
    %158 = vmatpush.xpose.msra.mxu0 %v100
    %159 = vmatpush.xpose.msra.mxu0 %v97
    %160 = vmatmul.f32.gmra.mxu0 %v82
    %v161 = vpop.f32.mrf.mxu0
    %v162 = vadd.f32 %v58, %v161
    %163 = vmatmul.f32.gmra.mxu0 %v85
    %v164 = vpop.f32.mrf.mxu0
    %v165 = vadd.f32 %v63, %v164
    %166 = vmatmul.f32.gmra.mxu0 %v88
    %v167 = vpop.f32.mrf.mxu0
    %v168 = vadd.f32 %v68, %v167
    %169 = vmatmul.f32.gmra.mxu0 %v91
    %v170 = vpop.f32.mrf.mxu0
    %v171 = vadd.f32 %v73, %v170
    %172 = vmatmul.f32.gmra.mxu0 %v94
    %v173 = vpop.f32.mrf.mxu0
    %v174 = vadd.f32 %v78, %v173
    %175 = vdwg.mxu0
    %v176 = vmax.f32 %v162, 0.0
    %v177 = vmax.f32 %v165, 0.0
    %v178 = vmax.f32 %v168, 0.0
    %v179 = vmax.f32 %v171, 0.0
    %v180 = vmax.f32 %v174, 0.0
    %v181 = vld [vmem:[%s3] sm:$0xff]
    %v182 = vld [vmem:[%s3 + $0x8] sm:$0xff]
    %v183 = vld [vmem:[%s3 + $0x10] sm:$0xff]
    %v184 = vld [vmem:[%s3 + $0x18] sm:$0xff]
    %v185 = vld [vmem:[%s3 + $0x20] sm:$0xff]
    %v186 = vld [vmem:[%s4] sm:$0xff]
    %v187 = vld [vmem:[%s4 + $0x8] sm:$0xff]
    %v188 = vld [vmem:[%s4 + $0x10] sm:$0xff]
    %v189 = vld [vmem:[%s4 + $0x18] sm:$0xff]
    %v190 = vld [vmem:[%s4 + $0x20] sm:$0xff]
    %192 = vset.pattern.permute.xlu0 0
    %193 = vperm.xlu0 %192, %v186
    %v194 = vpop.permute.xlu0 %193
    %197 = vset.pattern.permute.xlu0 0
    %198 = vperm.xlu0 %197, %v187
    %v199 = vpop.permute.xlu0 %198
    %202 = vset.pattern.permute.xlu0 0
    %203 = vperm.xlu0 %202, %v188
    %v204 = vpop.permute.xlu0 %203
    %207 = vset.pattern.permute.xlu0 0
    %208 = vperm.xlu0 %207, %v189
    %v209 = vpop.permute.xlu0 %208
    %212 = vset.pattern.permute.xlu0 0
    %213 = vperm.xlu0 %212, %v190
    %v214 = vpop.permute.xlu0 %213
    %vm216 = vcmask 326656
    %v218 = vsel %vm216, %v181, 0
    %v221 = vsel %vm216, %v182, 0
    %v224 = vsel %vm216, %v183, 0
    %v227 = vsel %vm216, %v184, 0
    %v230 = vsel %vm216, %v185, 0
    %232 = vmatpush.msra.mxu0 0.0
    %233 = vmatpush.msra.mxu0 0.0
    %234 = vmatpush.msra.mxu0 0.0
    %235 = vmatpush.msra.mxu0 0.0
    %236 = vmatpush.msra.mxu0 0.0
    %237 = vmatpush.msra.mxu0 0.0
    %238 = vmatpush.msra.mxu0 0.0
    %239 = vmatpush.msra.mxu0 0.0
    %240 = vmatpush.msra.mxu0 0.0
    %241 = vmatpush.msra.mxu0 0.0
    %242 = vmatpush.msra.mxu0 0.0
    %243 = vmatpush.msra.mxu0 %v180
    %244 = vmatpush.msra.mxu0 %v179
    %245 = vmatpush.msra.mxu0 %v178
    %246 = vmatpush.msra.mxu0 %v177
    %247 = vmatpush.msra.mxu0 %v176
    %248 = vmatmul.f32.gmra.mxu0 %v218
    %v249 = vpop.f32.mrf.mxu0
    %v250 = vadd.f32 %v194, %v249
    %251 = vmatmul.f32.gmra.mxu0 %v221
    %v252 = vpop.f32.mrf.mxu0
    %v253 = vadd.f32 %v199, %v252
    %254 = vmatmul.f32.gmra.mxu0 %v224
    %v255 = vpop.f32.mrf.mxu0
    %v256 = vadd.f32 %v204, %v255
    %257 = vmatmul.f32.gmra.mxu0 %v227
    %v258 = vpop.f32.mrf.mxu0
    %v259 = vadd.f32 %v209, %v258
    %260 = vmatmul.f32.gmra.mxu0 %v230
    %v261 = vpop.f32.mrf.mxu0
    %v262 = vadd.f32 %v214, %v261
    %263 = vdwg.mxu0
    %v264 = vmax.f32 %v250, 0.0
    %v265 = vmax.f32 %v253, 0.0
    %v266 = vmax.f32 %v256, 0.0
    %v267 = vmax.f32 %v259, 0.0
    %v268 = vmax.f32 %v262, 0.0
    %v269 = vld [vmem:[%s5] sm:$0xff]
    %v270 = vld [vmem:[%s5 + $0x8] sm:$0xff]
    %v271 = vld [vmem:[%s5 + $0x10] sm:$0xff]
    %v272 = vld [vmem:[%s5 + $0x18] sm:$0xff]
    %v273 = vld [vmem:[%s5 + $0x20] sm:$0xff]
    %275 = vset.pattern.permute.xlu0 0
    %276 = vperm.xlu0 %275, %v269
    %v277 = vpop.permute.xlu0 %276
    %280 = vset.pattern.permute.xlu0 0
    %281 = vperm.xlu0 %280, %v270
    %v282 = vpop.permute.xlu0 %281
    %285 = vset.pattern.permute.xlu0 0
    %286 = vperm.xlu0 %285, %v271
    %v287 = vpop.permute.xlu0 %286
    %290 = vset.pattern.permute.xlu0 0
    %291 = vperm.xlu0 %290, %v272
    %v292 = vpop.permute.xlu0 %291
    %295 = vset.pattern.permute.xlu0 0
    %296 = vperm.xlu0 %295, %v273
    %v297 = vpop.permute.xlu0 %296
    %v299 = vmul.f32 %v264, %v277
    %v300 = vmul.f32 %v265, %v282
    %v301 = vmul.f32 %v266, %v287
    %v302 = vmul.f32 %v267, %v292
    %v303 = vmul.f32 %v268, %v297
    %v304 = vadd.f32 %v299, %v300
    %v305 = vadd.f32 %v304, %v301
    %v306 = vadd.f32 %v305, %v302
    %v307 = vadd.f32 %v306, %v303
    %v308 = vrot.slane %v307, 4
    %v309 = vadd.f32 %v307, %v308
    %v310 = vrot.slane %v309, 2
    %v311 = vadd.f32 %v309, %v310
    %v312 = vrot.slane %v311, 1
    %v313 = vadd.f32 %v311, %v312
    %v314 = vld [vmem:[#allocation2] sm:$0x1]
    %316 = vset.pattern.permute.xlu0 0
    %317 = vperm.xlu0 %316, %v314
    %v318 = vpop.permute.xlu0 %317
    %v320 = vperm.slane %v318, 0
    %v321 = vadd.f32 %v313, %v320
    %v322 = vxor.u32 %v321, 2147483648
    %v323 = vmul.f32 %v322, 1.442695
    %v324 = vpow.pop %v323
    %v325 = vadd.f32 %v324, 1.0
    %v326 = vrcp.pop %v325
    %v327 = vmul.f32 %v325, %v326
    %v328 = vsub.f32 1.0, %v327
    %v329 = vmul.f32 %v326, %v328
    %v330 = vadd.f32 %v326, %v329
    %vm331 = vweird.f32 %v325
    %vm332 = vweird.f32 %v326
    %vm333 = vmor %vm331, %vm332
    %v334 = vsel %vm333, %v326, %v330
    %v335 = vand.u32 2147483647, %v325
    %vm336 = vcmp.eq.f32.partialorder %v335, 8.507059e+37
    %v337 = vand.u32 %v325, 2147483648
    %v338 = vor.u32 1.1754944e-38, %v337
    %v339 = vsel %vm336, %v338, %v334
    %v340 = vmul.f32 1.0, %v339
    %341 = vst [vmem:[#allocation3] sm:$0x1] %v340
    // Predicated region
    $region30: #{tpu_custom_call.1} parent=1 // pred_check
      _
    $region31: #{tpu_custom_call.1} parent=1 // pred_check_branch
      %343 = sbr.rel (0) target = $region33
    $region32: #{tpu_custom_call.1} parent=1 // pred_region
      %345 = vsyncadd [#allocation4], 0
      %s347 = sshll.u32 [#allocation3], 4
      %s348 = int_to_ptr.vmem [resolvable:$true] %s347
      %s349 = sshll.u32 %s7, 4
      %s350 = int_to_ptr.hbm [resolvable:$true] %s349
      %352 = dma.vmem_to_hbm [thread:$0]  %s348, 16, %s350, [#allocation4]
    $region33: #{tpu_custom_call.1} parent=1 // pred_fallthru
      _
    // Predicated region
    $region34: #{tpu_custom_call.1} parent=1 // pred_check
      _
    $region35: #{tpu_custom_call.1} parent=1 // pred_check_branch
      %354 = sbr.rel (0) target = $region37
    $region36: #{tpu_custom_call.1} parent=1 // pred_region
      %356 = dma.done [#allocation4], 16
    $region37: #{tpu_custom_call.1} parent=1 // pred_fallthru
      _
    %357 = vsyncpa [#allocation4], 1

</llo_original>
